<compile_context>
chip_gen: v6e
topology: v6e:2x2x1
jax: 0.10.0
libtpu: 0.0.40
codegen_flags: <defaults>
</compile_context>

<pallas_src>
import functools

import jax
import jax.numpy as jnp
from jax import lax
from jax.experimental import pallas as pl
from jax.experimental.pallas import tpu as pltpu


# ---- the Pallas kernel -------------------------------------------------------
def _se_kernel(x_ref, w1t_ref, w2t_ref, o_ref, *, inv_seq):
    f32 = jnp.float32

    x = x_ref[...]                                                     # (Bt, S, F)

    # squeeze: mean over the sequence axis (AdaptiveAvgPool1d(1) after permute)
    y = jnp.sum(x, axis=1) * inv_seq                                   # (Bt, F)

    # excite: fc1 -> ReLU -> fc2 -> sigmoid  (two MXU matmuls with M = Bt)
    h = jnp.maximum(jnp.dot(y, w1t_ref[...], preferred_element_type=f32), 0.0)  # (Bt, H)
    z = jnp.dot(h, w2t_ref[...], preferred_element_type=f32)                    # (Bt, F)
    s = 1.0 / (1.0 + jnp.exp(-z))                                      # sigmoid  (Bt, F)

    # scale: broadcast the per-(batch, channel) gate over the sequence axis
    o_ref[...] = x * s[:, None, :]


# ---- wrapper (glue: transposes weights, tiles the batch, calls pallas_call) ---
@functools.partial(jax.jit, static_argnames=("b_tile",))
def se_forward(x, w_fc1, w_fc2, *, b_tile=8):
    """SELayer forward.  x: (B, S, F); w_fc1: (F//r, F); w_fc2: (F, F//r)."""
    B, S, F = x.shape
    H = w_fc1.shape[0]
    assert w_fc1.shape == (H, F), w_fc1.shape
    assert w_fc2.shape == (F, H), w_fc2.shape

    bt = min(b_tile, B)
    pad = (-B) % bt
    xf = x.astype(jnp.float32)
    if pad:
        xf = jnp.concatenate([xf, jnp.zeros((pad, S, F), jnp.float32)], axis=0)
    Bp = B + pad

    w1t = w_fc1.T.astype(jnp.float32)                                  # (F, H)
    w2t = w_fc2.T.astype(jnp.float32)                                  # (H, F)

    kernel = functools.partial(_se_kernel, inv_seq=1.0 / S)

    out = pl.pallas_call(
        kernel,
        grid_spec=pltpu.PrefetchScalarGridSpec(
            num_scalar_prefetch=0,
            grid=(Bp // bt,),
            in_specs=[
                pl.BlockSpec((bt, S, F), lambda b: (b, 0, 0)),         # batch tile of x
                pl.BlockSpec((F, H), lambda b: (0, 0)),                # fc1 weight (transposed)
                pl.BlockSpec((H, F), lambda b: (0, 0)),                # fc2 weight (transposed)
            ],
            out_specs=pl.BlockSpec((bt, S, F), lambda b: (b, 0, 0)),
        ),
        out_shape=jax.ShapeDtypeStruct((Bp, S, F), jnp.float32),
        compiler_params=pltpu.CompilerParams(
            dimension_semantics=("parallel",)),                        # v7x: split batch across TCs
    )(xf, w1t, w2t)

    return out[:B]


# ---- pure-JAX reference (mirrors the PyTorch forward exactly) ------------------
def reference_forward(x, w_fc1, w_fc2):
    hp = lax.Precision.HIGHEST
    y = jnp.mean(x, axis=1)                                            # (B, F)
    y = jnp.maximum(jnp.dot(y, w_fc1.T, precision=hp), 0.0)            # (B, H)
    y = jnp.dot(y, w_fc2.T, precision=hp)                              # (B, F)
    y = 1.0 / (1.0 + jnp.exp(-y))
    return x * y[:, None, :]


if __name__ == "__main__":
    # SELayer(channel=F, reduction=4) applied to x of shape (batch, seq, channel)
    B, S, F = 16, 64, 128
    reduction = 4
    H = F // reduction                                                 # 32

    key = jax.random.PRNGKey(0)
    kx, k1, k2 = jax.random.split(key, 3)
    x = jax.random.normal(kx, (B, S, F), jnp.float32)
    w_fc1 = (1.0 / jnp.sqrt(F)) * jax.random.normal(k1, (H, F), jnp.float32)
    w_fc2 = (1.0 / jnp.sqrt(H)) * jax.random.normal(k2, (F, H), jnp.float32)

    out = se_forward(x, w_fc1, w_fc2, b_tile=8)
    out = jax.block_until_ready(out)
    assert out.shape == (B, S, F), out.shape

    ref = reference_forward(x, w_fc1, w_fc2)
    if not bool(jnp.allclose(out, ref, atol=2e-3, rtol=2e-3)):
        raise AssertionError("Pallas SELayer output does not match JAX reference")
    print("KERNEL_OK")
</pallas_src>

<mosaic_0001>
module attributes {stable_mosaic.version = 11 : i64} {
  func.func @_se_kernel(%arg0: i32, %arg1: memref<8x64x128xf32, #tpu.memory_space<vmem>>, %arg2: memref<128x32xf32, #tpu.memory_space<vmem>>, %arg3: memref<32x128xf32, #tpu.memory_space<vmem>>, %arg4: memref<8x64x128xf32, #tpu.memory_space<vmem>>) attributes {dimension_semantics = [#tpu.dimension_semantics<parallel>], iteration_bounds = array<i64: 2>, scalar_prefetch = 0 : i64, scratch_operands = 0 : i64, tpu.core_type = #tpu.core_type<tc>, window_params = [{transform_indices = @transform_0, window_bounds = array<i64: 8, 64, 128>}, {pipeline_mode = #tpu.pipeline_mode<synchronous>, transform_indices = @transform_1, window_bounds = array<i64: 128, 32>}, {pipeline_mode = #tpu.pipeline_mode<synchronous>, transform_indices = @transform_2, window_bounds = array<i64: 32, 128>}, {transform_indices = @transform_3, window_bounds = array<i64: 8, 64, 128>}]} {
    %c0 = arith.constant 0 : index
    %c0_0 = arith.constant 0 : index
    %c0_1 = arith.constant 0 : index
    %0 = vector.load %arg1[%c0, %c0_0, %c0_1] : memref<8x64x128xf32, #tpu.memory_space<vmem>>, vector<8x64x128xf32>
    %cst = arith.constant dense<0.000000e+00> : vector<8x128xf32>
    %1 = vector.multi_reduction <add>, %0, %cst [1] : vector<8x64x128xf32> to vector<8x128xf32>
    %cst_2 = arith.constant 1.562500e-02 : f32
    %2 = vector.broadcast %cst_2 : f32 to vector<8x128xf32>
    %3 = arith.mulf %1, %2 : vector<8x128xf32>
    %c0_3 = arith.constant 0 : index
    %c0_4 = arith.constant 0 : index
    %4 = vector.load %arg2[%c0_3, %c0_4] : memref<128x32xf32, #tpu.memory_space<vmem>>, vector<128x32xf32>
    %cst_5 = arith.constant dense<0.000000e+00> : vector<8x32xf32>
    %5 = tpu.matmul %3, %4, %cst_5 {dimension_numbers = #tpu.dot_dimension_numbers<[1], [0], [0], [1], [0, 0, 1, 1], [], []>} : vector<8x128xf32>, vector<128x32xf32>, vector<8x32xf32> -> vector<8x32xf32>
    %cst_6 = arith.constant 0.000000e+00 : f32
    %6 = vector.broadcast %cst_6 : f32 to vector<8x32xf32>
    %7 = arith.maximumf %5, %6 : vector<8x32xf32>
    %c0_7 = arith.constant 0 : index
    %c0_8 = arith.constant 0 : index
    %8 = vector.load %arg3[%c0_7, %c0_8] : memref<32x128xf32, #tpu.memory_space<vmem>>, vector<32x128xf32>
    %cst_9 = arith.constant dense<0.000000e+00> : vector<8x128xf32>
    %9 = tpu.matmul %7, %8, %cst_9 {dimension_numbers = #tpu.dot_dimension_numbers<[1], [0], [0], [1], [0, 0, 1, 1], [], []>} : vector<8x32xf32>, vector<32x128xf32>, vector<8x128xf32> -> vector<8x128xf32>
    %cst_10 = arith.constant 0.000000e+00 : f32
    %10 = vector.broadcast %cst_10 : f32 to vector<8x128xf32>
    %11 = arith.subf %10, %9 : vector<8x128xf32>
    %12 = math.exp %11 : vector<8x128xf32>
    %cst_11 = arith.constant 1.000000e+00 : f32
    %13 = vector.broadcast %cst_11 : f32 to vector<8x128xf32>
    %14 = arith.addf %13, %12 : vector<8x128xf32>
    %cst_12 = arith.constant 1.000000e+00 : f32
    %15 = vector.broadcast %cst_12 : f32 to vector<8x128xf32>
    %16 = arith.divf %15, %14 : vector<8x128xf32>
    %17 = vector.shape_cast %16 : vector<8x128xf32> to vector<8x1x128xf32>
    %18 = vector.broadcast %17 : vector<8x1x128xf32> to vector<8x64x128xf32>
    %19 = arith.mulf %0, %18 : vector<8x64x128xf32>
    %c0_13 = arith.constant 0 : index
    %c0_14 = arith.constant 0 : index
    %c0_15 = arith.constant 0 : index
    %20 = vector.load %arg4[%c0_13, %c0_14, %c0_15] : memref<8x64x128xf32, #tpu.memory_space<vmem>>, vector<8x64x128xf32>
    tpu.vector_store %arg4[%c0_13, %c0_14, %c0_15], %19 {strides = array<i32>} : memref<8x64x128xf32, #tpu.memory_space<vmem>>, vector<8x64x128xf32>,
    return
  }
  func.func @transform_0(%arg0: i32) -> (i32, i32, i32) {
    %c0_i32 = arith.constant 0 : i32
    %c0_i32_0 = arith.constant 0 : i32
    %c0_i32_1 = arith.constant 0 : i32
    return %arg0, %c0_i32, %c0_i32_0 : i32, i32, i32
  }
  func.func @transform_1(%arg0: i32) -> (i32, i32) {
    %c0_i32 = arith.constant 0 : i32
    %c0_i32_0 = arith.constant 0 : i32
    %c0_i32_1 = arith.constant 0 : i32
    return %c0_i32, %c0_i32_0 : i32, i32
  }
  func.func @transform_2(%arg0: i32) -> (i32, i32) {
    %c0_i32 = arith.constant 0 : i32
    %c0_i32_0 = arith.constant 0 : i32
    %c0_i32_1 = arith.constant 0 : i32
    return %c0_i32, %c0_i32_0 : i32, i32
  }
  func.func @transform_3(%arg0: i32) -> (i32, i32, i32) {
    %c0_i32 = arith.constant 0 : i32
    %c0_i32_0 = arith.constant 0 : i32
    %c0_i32_1 = arith.constant 0 : i32
    return %arg0, %c0_i32, %c0_i32_0 : i32, i32, i32
  }
}

</mosaic_0001>

<llo_original>
// kernel: se_forward.1
$region0: #{se_forward.1}
  #allocation0 [shape = 'u32[]', space=smem, size = 0x4, offset = 0x4, fixed_abs, tag = 'smem constant byte address 0x4 - core index']
  #allocation1 [shape = 'u32[144,128]{1,0:T(1,128)}', space=vmem, size = 0x12000, scoped, tag = 'internal scratch']
  %s0 = inlined_call_operand.hbm [shape: f32[16,64,128], index: 0, kind: input, shape index: {}]
  %s1 = inlined_call_operand.vmem [shape: f32[128,32], index: 1, kind: input, shape index: {}]
  %s2 = inlined_call_operand.vmem [shape: f32[32,128], index: 2, kind: input, shape index: {}]
  %s3 = inlined_call_operand.hbm [shape: f32[16,64,128], index: 3, kind: output, shape index: {}]
  %s4 = sld [smem:[#allocation0]]
  $region49: #{se_forward.1} parent=0
    _
  %s6 = ssub.s32 1, %s4
  %s7 = scalar_select 0, %s6, %s4
  $region1: #{se_forward.1} parent=0
    #allocation2 [shape = 'u8[524288]{0}', space=vmem, size = 0x80000, scoped, tag = 'input window, operand 0']
    #allocation3 [shape = 's32[2]{0}', space=sflag, size = 0x8, scoped, tag = 'scoped memory for se_forward.1']
    #allocation4 [shape = 's32[2]{0}', space=sflag, size = 0x8, scoped, tag = 'scoped memory for se_forward.1']
    #allocation5 [shape = 'u8[524288]{0}', space=vmem, size = 0x80000, scoped, tag = 'output window, operand 0']
    %8 = vsyncpa [#allocation3], 0
    %s9 = scalar_lea.sflag [#allocation3], 1
    %10 = vsyncpa %s9, 0
    %11 = vsyncpa [#allocation4], 0
    %s12 = scalar_lea.sflag [#allocation4], 1
    %13 = vsyncpa %s12, 0
    loop: start=0, step=1, limit=4
    $region2: #{se_forward.1} parent=1 // loop_pre_header
      _
    $region3: #{se_forward.1} parent=1 // loop_header
      %s15 = sphi 0, %s19
      %p16 = scmp.ge.s32.totalorder %s15, 4
      %s25 = sphi 0, %s27
      %s28 = sphi 0, %s25
      %s29 = sphi 0, %s28
      %s45 = sphi 0, %s29
      %s49 = sphi 0, %s49
      %s51 = sphi 0, %s49
      %s52 = sphi 0, %s51
      %s66 = sphi 0, %s52
      %s70 = sphi 0, %s70
      %s72 = sphi 0, %s70
      %s73 = sphi 0, %s72
      %s87 = sphi 0, %s73
      %s93 = sphi 0, %s95
      %s96 = sphi 0, %s93
      %s97 = sphi 0, %s96
      %s113 = sphi 0, %s97
    $region4: #{se_forward.1} parent=1 // loop_header_branch
      %18 = sbr.rel (%p16) target = $region8
    $region5: #{se_forward.1} parent=1 // loop_body
      %s20 = ssub.s32 %s15, 1
      %s21 = ssub.s32 %s15, 2
      %s22 = sadd.s32 %s15, 1
      %s23 = ssub.s32 %s15, %s22
      %p24 = scmp.eq.s32.totalorder %s23, 0
      %s26 = sadd.s32 %s25, 1
      %s27 = scalar_select %p24, %s25, %s26
      %p30 = pneg %p24
      %p31 = scmp.eq.s32.totalorder %s15, 1
      %p32 = por %p30, %p31
      %p33 = scmp.ne.s32.totalorder %s25, %s28
      %p34 = scmp.eq.s32.totalorder %s15, 0
      %p35 = por %p33, %p34
      %p36 = scmp.ne.s32.totalorder %s25, %s28
      %p37 = scmp.eq.s32.totalorder %s20, 1
      %p38 = por %p36, %p37
      %p39 = scmp.ne.s32.totalorder %s28, %s29
      %p40 = scmp.eq.s32.totalorder %s20, 0
      %p41 = por %p39, %p40
      %p42 = scmp.ne.s32.totalorder %s28, %s29
      %p43 = scmp.eq.s32.totalorder %s21, 1
      %p44 = por %p42, %p43
      %p46 = scmp.ne.s32.totalorder %s29, %s45
      %p47 = scmp.eq.s32.totalorder %s21, 0
      %p48 = por %p46, %p47
      %s50 = sadd.s32 %s49, 1
      %p53 = scmp.eq.s32.totalorder %s15, 1
      %p54 = scmp.ne.s32.totalorder %s49, %s51
      %p55 = scmp.eq.s32.totalorder %s15, 0
      %p56 = por %p54, %p55
      %p57 = scmp.ne.s32.totalorder %s49, %s51
      %p58 = scmp.eq.s32.totalorder %s20, 1
      %p59 = por %p57, %p58
      %p60 = scmp.ne.s32.totalorder %s51, %s52
      %p61 = scmp.eq.s32.totalorder %s20, 0
      %p62 = por %p60, %p61
      %p63 = scmp.ne.s32.totalorder %s51, %s52
      %p64 = scmp.eq.s32.totalorder %s21, 1
      %p65 = por %p63, %p64
      %p67 = scmp.ne.s32.totalorder %s52, %s66
      %p68 = scmp.eq.s32.totalorder %s21, 0
      %p69 = por %p67, %p68
      %s71 = sadd.s32 %s70, 1
      %p74 = scmp.eq.s32.totalorder %s15, 1
      %p75 = scmp.ne.s32.totalorder %s70, %s72
      %p76 = scmp.eq.s32.totalorder %s15, 0
      %p77 = por %p75, %p76
      %p78 = scmp.ne.s32.totalorder %s70, %s72
      %p79 = scmp.eq.s32.totalorder %s20, 1
      %p80 = por %p78, %p79
      %p81 = scmp.ne.s32.totalorder %s72, %s73
      %p82 = scmp.eq.s32.totalorder %s20, 0
      %p83 = por %p81, %p82
      %p84 = scmp.ne.s32.totalorder %s72, %s73
      %p85 = scmp.eq.s32.totalorder %s21, 1
      %p86 = por %p84, %p85
      %p88 = scmp.ne.s32.totalorder %s73, %s87
      %p89 = scmp.eq.s32.totalorder %s21, 0
      %p90 = por %p88, %p89
      %s91 = ssub.s32 %s15, %s22
      %p92 = scmp.eq.s32.totalorder %s91, 0
      %s94 = sadd.s32 %s93, 1
      %s95 = scalar_select %p92, %s93, %s94
      %p98 = pneg %p92
      %p99 = scmp.eq.s32.totalorder %s15, 1
      %p100 = por %p98, %p99
      %p101 = scmp.ne.s32.totalorder %s93, %s96
      %p102 = scmp.eq.s32.totalorder %s15, 0
      %p103 = por %p101, %p102
      %p104 = scmp.ne.s32.totalorder %s93, %s96
      %p105 = scmp.eq.s32.totalorder %s20, 1
      %p106 = por %p104, %p105
      %p107 = scmp.ne.s32.totalorder %s96, %s97
      %p108 = scmp.eq.s32.totalorder %s20, 0
      %p109 = por %p107, %p108
      %p110 = scmp.ne.s32.totalorder %s96, %s97
      %p111 = scmp.eq.s32.totalorder %s21, 1
      %p112 = por %p110, %p111
      %p114 = scmp.ne.s32.totalorder %s97, %s113
      %p115 = scmp.eq.s32.totalorder %s21, 0
      %p116 = por %p114, %p115
      %p117 = scmp.le.s32.totalorder 1, %s15
      %p118 = scmp.lt.s32.totalorder %s15, 3
      %p119 = pnand %p117, %p118
      %p120 = pneg %p119
      // Predicated region
      $region9: #{se_forward.1} parent=5 // pred_check
        _
      $region10: #{se_forward.1} parent=5 // pred_check_branch
        %122 = sbr.rel (%p119) target = $region12
      $region11: #{se_forward.1} parent=5 // pred_region
        %s123 = ssub.s32 %s15, 1
        // Predicated region
        $region13: #{se_forward.1} parent=11 // pred_check
          %p124 = pneg %p62
        $region14: #{se_forward.1} parent=11 // pred_check_branch
          %126 = sbr.rel (%p124) target = $region16
        $region15: #{se_forward.1} parent=11 // pred_region
          _
        $region16: #{se_forward.1} parent=11 // pred_fallthru
          _
        // Predicated region
        $region17: #{se_forward.1} parent=11 // pred_check
          %p127 = pneg %p83
        $region18: #{se_forward.1} parent=11 // pred_check_branch
          %129 = sbr.rel (%p127) target = $region20
        $region19: #{se_forward.1} parent=11 // pred_region
          _
        $region20: #{se_forward.1} parent=11 // pred_fallthru
          _
      $region12: #{se_forward.1} parent=5 // pred_fallthru
        _
      %p130 = scmp.lt.s32.totalorder %s15, 2
      // Predicated region
      $region21: #{se_forward.1} parent=5 // pred_check
        %p131 = pneg %p130
      $region22: #{se_forward.1} parent=5 // pred_check_branch
        %133 = sbr.rel (%p131) target = $region24
      $region23: #{se_forward.1} parent=5 // pred_region
        // Predicated region
        $region25: #{se_forward.1} parent=23 // pred_check
          %p134 = pneg %p35
        $region26: #{se_forward.1} parent=23 // pred_check_branch
          %136 = sbr.rel (%p134) target = $region28
        $region27: #{se_forward.1} parent=23 // pred_region
          %s137 = sand.u32 %s25, 1
          %s138 = scalar_lea.sflag [#allocation3], %s137
          %s139 = sand.u32 %s25, 1
          %s140 = smul.addr %s139, 512
          %s141 = scalar_lea.vmem [#allocation2], %s140
          %s142 = smul.u32 8, %s15
          %s144 = ssub.s32 8192, 8192
          %145 = vsyncadd %s138, %s144
          %s146 = smul.addr %s142, 8
          %s147 = smul.addr %s146, 128
          %s148 = scalar_lea.hbm %s0, %s147
          %s149 = sshll.u32 %s141, 4
          %s150 = int_to_ptr.vmem [resolvable:$true] %s149
          %155 = dma.hbm_to_vmem [thread:$0]  %s148, 8192, %s150, %s138, 128, 128, 8
        $region28: #{se_forward.1} parent=23 // pred_fallthru
          _
      $region24: #{se_forward.1} parent=5 // pred_fallthru
        _
      %p156 = scmp.le.s32.totalorder 1, %s15
      %p157 = scmp.lt.s32.totalorder %s15, 3
      %p158 = pnand %p156, %p157
      %p159 = pneg %p158
      // Predicated region
      $region29: #{se_forward.1} parent=5 // pred_check
        _
      $region30: #{se_forward.1} parent=5 // pred_check_branch
        %161 = sbr.rel (%p158) target = $region32
      $region31: #{se_forward.1} parent=5 // pred_region
        %s162 = ssub.s32 %s15, 1
        %s163 = sand.u32 %s28, 1
        %s164 = scalar_lea.sflag [#allocation3], %s163
        %s165 = sand.u32 %s28, 1
        %s166 = smul.addr %s165, 512
        %s167 = scalar_lea.vmem [#allocation2], %s166
        // Predicated region
        $region33: #{se_forward.1} parent=31 // pred_check
          %p168 = pneg %p41
        $region34: #{se_forward.1} parent=31 // pred_check_branch
          %170 = sbr.rel (%p168) target = $region36
        $region35: #{se_forward.1} parent=31 // pred_region
          %171 = dma.done %s164, 8192
        $region36: #{se_forward.1} parent=31 // pred_fallthru
          _
        %s172 = sand.u32 %s28, 1
        %s173 = scalar_lea.sflag [#allocation3], %s172
        %s174 = sand.u32 %s28, 1
        %s175 = smul.addr %s174, 512
        %s176 = scalar_lea.vmem [#allocation2], %s175
        %p177 = pneg %p41
        %p178 = pneg %p38
        %p179 = pneg %p62
        %p180 = pneg %p59
        %p181 = pneg %p83
        %p182 = pneg %p80
        %p183 = pneg %p109
        %p184 = pneg %p106
        %s185 = sand.u32 %s96, 1
        %s186 = scalar_lea.sflag [#allocation4], %s185
        %s187 = sand.u32 %s96, 1
        %s188 = smul.addr %s187, 512
        %s189 = scalar_lea.vmem [#allocation5], %s188
        %s190 = smul.u32 8, %s20
        %s191 = smul.u32 8, %s20
        %v192 = vld [vmem:[%s167] sm:$0xff]
        %v193 = vld [vmem:[%s167 + $0x8] sm:$0xff]
        %v194 = vld [vmem:[%s167 + $0x10] sm:$0xff]
        %v195 = vld [vmem:[%s167 + $0x18] sm:$0xff]
        %v196 = vld [vmem:[%s167 + $0x20] sm:$0xff]
        %v197 = vld [vmem:[%s167 + $0x28] sm:$0xff]
        %v198 = vld [vmem:[%s167 + $0x30] sm:$0xff]
        %v199 = vld [vmem:[%s167 + $0x38] sm:$0xff]
        %v200 = vld [vmem:[%s167 + $0x40] sm:$0xff]
        %v201 = vld [vmem:[%s167 + $0x48] sm:$0xff]
        %v202 = vld [vmem:[%s167 + $0x50] sm:$0xff]
        %v203 = vld [vmem:[%s167 + $0x58] sm:$0xff]
        %v204 = vld [vmem:[%s167 + $0x60] sm:$0xff]
        %v205 = vld [vmem:[%s167 + $0x68] sm:$0xff]
        %v206 = vld [vmem:[%s167 + $0x70] sm:$0xff]
        %v207 = vld [vmem:[%s167 + $0x78] sm:$0xff]
        %v208 = vld [vmem:[%s167 + $0x80] sm:$0xff]
        %v209 = vld [vmem:[%s167 + $0x88] sm:$0xff]
        %v210 = vld [vmem:[%s167 + $0x90] sm:$0xff]
        %v211 = vld [vmem:[%s167 + $0x98] sm:$0xff]
        %v212 = vld [vmem:[%s167 + $0xa0] sm:$0xff]
        %v213 = vld [vmem:[%s167 + $0xa8] sm:$0xff]
        %v214 = vld [vmem:[%s167 + $0xb0] sm:$0xff]
        %v215 = vld [vmem:[%s167 + $0xb8] sm:$0xff]
        %v216 = vld [vmem:[%s167 + $0xc0] sm:$0xff]
        %v217 = vld [vmem:[%s167 + $0xc8] sm:$0xff]
        %v218 = vld [vmem:[%s167 + $0xd0] sm:$0xff]
        %v219 = vld [vmem:[%s167 + $0xd8] sm:$0xff]
        %v220 = vld [vmem:[%s167 + $0xe0] sm:$0xff]
        %v221 = vld [vmem:[%s167 + $0xe8] sm:$0xff]
        %v222 = vld [vmem:[%s167 + $0xf0] sm:$0xff]
        %v223 = vld [vmem:[%s167 + $0xf8] sm:$0xff]
        %v224 = vld [vmem:[%s167 + $0x100] sm:$0xff]
        %v225 = vld [vmem:[%s167 + $0x108] sm:$0xff]
        %v226 = vld [vmem:[%s167 + $0x110] sm:$0xff]
        %v227 = vld [vmem:[%s167 + $0x118] sm:$0xff]
        %v228 = vld [vmem:[%s167 + $0x120] sm:$0xff]
        %v229 = vld [vmem:[%s167 + $0x128] sm:$0xff]
        %v230 = vld [vmem:[%s167 + $0x130] sm:$0xff]
        %v231 = vld [vmem:[%s167 + $0x138] sm:$0xff]
        %v232 = vld [vmem:[%s167 + $0x140] sm:$0xff]
        %v233 = vld [vmem:[%s167 + $0x148] sm:$0xff]
        %v234 = vld [vmem:[%s167 + $0x150] sm:$0xff]
        %v235 = vld [vmem:[%s167 + $0x158] sm:$0xff]
        %v236 = vld [vmem:[%s167 + $0x160] sm:$0xff]
        %v237 = vld [vmem:[%s167 + $0x168] sm:$0xff]
        %v238 = vld [vmem:[%s167 + $0x170] sm:$0xff]
        %v239 = vld [vmem:[%s167 + $0x178] sm:$0xff]
        %v240 = vld [vmem:[%s167 + $0x180] sm:$0xff]
        %v241 = vld [vmem:[%s167 + $0x188] sm:$0xff]
        %v242 = vld [vmem:[%s167 + $0x190] sm:$0xff]
        %v243 = vld [vmem:[%s167 + $0x198] sm:$0xff]
        %v244 = vld [vmem:[%s167 + $0x1a0] sm:$0xff]
        %v245 = vld [vmem:[%s167 + $0x1a8] sm:$0xff]
        %v246 = vld [vmem:[%s167 + $0x1b0] sm:$0xff]
        %v247 = vld [vmem:[%s167 + $0x1b8] sm:$0xff]
        %v248 = vld [vmem:[%s167 + $0x1c0] sm:$0xff]
        %v249 = vld [vmem:[%s167 + $0x1c8] sm:$0xff]
        %v250 = vld [vmem:[%s167 + $0x1d0] sm:$0xff]
        %v251 = vld [vmem:[%s167 + $0x1d8] sm:$0xff]
        %v252 = vld [vmem:[%s167 + $0x1e0] sm:$0xff]
        %v253 = vld [vmem:[%s167 + $0x1e8] sm:$0xff]
        %v254 = vld [vmem:[%s167 + $0x1f0] sm:$0xff]
        %v255 = vld [vmem:[%s167 + $0x1f8] sm:$0xff]
        %v256 = vadd.f32 %v192, %v193
        %v257 = vadd.f32 %v256, %v194
        %v258 = vadd.f32 %v257, %v195
        %v259 = vadd.f32 %v258, %v196
        %v260 = vadd.f32 %v259, %v197
        %v261 = vadd.f32 %v260, %v198
        %v262 = vadd.f32 %v261, %v199
        %v263 = vrot.slane %v262, 4
        %v264 = vadd.f32 %v262, %v263
        %v265 = vrot.slane %v264, 2
        %v266 = vadd.f32 %v264, %v265
        %v267 = vrot.slane %v266, 1
        %v268 = vadd.f32 %v266, %v267
        %v269 = vadd.f32 %v200, %v201
        %v270 = vadd.f32 %v269, %v202
        %v271 = vadd.f32 %v270, %v203
        %v272 = vadd.f32 %v271, %v204
        %v273 = vadd.f32 %v272, %v205
        %v274 = vadd.f32 %v273, %v206
        %v275 = vadd.f32 %v274, %v207
        %v276 = vrot.slane %v275, 4
        %v277 = vadd.f32 %v275, %v276
        %v278 = vrot.slane %v277, 2
        %v279 = vadd.f32 %v277, %v278
        %v280 = vrot.slane %v279, 1
        %v281 = vadd.f32 %v279, %v280
        %v282 = vadd.f32 %v208, %v209
        %v283 = vadd.f32 %v282, %v210
        %v284 = vadd.f32 %v283, %v211
        %v285 = vadd.f32 %v284, %v212
        %v286 = vadd.f32 %v285, %v213
        %v287 = vadd.f32 %v286, %v214
        %v288 = vadd.f32 %v287, %v215
        %v289 = vrot.slane %v288, 4
        %v290 = vadd.f32 %v288, %v289
        %v291 = vrot.slane %v290, 2
        %v292 = vadd.f32 %v290, %v291
        %v293 = vrot.slane %v292, 1
        %v294 = vadd.f32 %v292, %v293
        %v295 = vadd.f32 %v216, %v217
        %v296 = vadd.f32 %v295, %v218
        %v297 = vadd.f32 %v296, %v219
        %v298 = vadd.f32 %v297, %v220
        %v299 = vadd.f32 %v298, %v221
        %v300 = vadd.f32 %v299, %v222
        %v301 = vadd.f32 %v300, %v223
        %v302 = vrot.slane %v301, 4
        %v303 = vadd.f32 %v301, %v302
        %v304 = vrot.slane %v303, 2
        %v305 = vadd.f32 %v303, %v304
        %v306 = vrot.slane %v305, 1
        %v307 = vadd.f32 %v305, %v306
        %v308 = vadd.f32 %v224, %v225
        %v309 = vadd.f32 %v308, %v226
        %v310 = vadd.f32 %v309, %v227
        %v311 = vadd.f32 %v310, %v228
        %v312 = vadd.f32 %v311, %v229
        %v313 = vadd.f32 %v312, %v230
        %v314 = vadd.f32 %v313, %v231
        %v315 = vrot.slane %v314, 4
        %v316 = vadd.f32 %v314, %v315
        %v317 = vrot.slane %v316, 2
        %v318 = vadd.f32 %v316, %v317
        %v319 = vrot.slane %v318, 1
        %v320 = vadd.f32 %v318, %v319
        %v321 = vadd.f32 %v232, %v233
        %v322 = vadd.f32 %v321, %v234
        %v323 = vadd.f32 %v322, %v235
        %v324 = vadd.f32 %v323, %v236
        %v325 = vadd.f32 %v324, %v237
        %v326 = vadd.f32 %v325, %v238
        %v327 = vadd.f32 %v326, %v239
        %v328 = vrot.slane %v327, 4
        %v329 = vadd.f32 %v327, %v328
        %v330 = vrot.slane %v329, 2
        %v331 = vadd.f32 %v329, %v330
        %v332 = vrot.slane %v331, 1
        %v333 = vadd.f32 %v331, %v332
        %v334 = vadd.f32 %v240, %v241
        %v335 = vadd.f32 %v334, %v242
        %v336 = vadd.f32 %v335, %v243
        %v337 = vadd.f32 %v336, %v244
        %v338 = vadd.f32 %v337, %v245
        %v339 = vadd.f32 %v338, %v246
        %v340 = vadd.f32 %v339, %v247
        %v341 = vrot.slane %v340, 4
        %v342 = vadd.f32 %v340, %v341
        %v343 = vrot.slane %v342, 2
        %v344 = vadd.f32 %v342, %v343
        %v345 = vrot.slane %v344, 1
        %v346 = vadd.f32 %v344, %v345
        %v347 = vadd.f32 %v248, %v249
        %v348 = vadd.f32 %v347, %v250
        %v349 = vadd.f32 %v348, %v251
        %v350 = vadd.f32 %v349, %v252
        %v351 = vadd.f32 %v350, %v253
        %v352 = vadd.f32 %v351, %v254
        %v353 = vadd.f32 %v352, %v255
        %v354 = vrot.slane %v353, 4
        %v355 = vadd.f32 %v353, %v354
        %v356 = vrot.slane %v355, 2
        %v357 = vadd.f32 %v355, %v356
        %v358 = vrot.slane %v357, 1
        %v359 = vadd.f32 %v357, %v358
        %v360 = vmul.f32 %v268, 0.015625
        %v361 = vmul.f32 %v281, 0.015625
        %v362 = vmul.f32 %v294, 0.015625
        %v363 = vmul.f32 %v307, 0.015625
        %v364 = vmul.f32 %v320, 0.015625
        %v365 = vmul.f32 %v333, 0.015625
        %v366 = vmul.f32 %v346, 0.015625
        %v367 = vmul.f32 %v359, 0.015625
        %v368 = vld [vmem:[%s1] sm:$0xff]
        %v369 = vld [vmem:[%s1 + $0x8] sm:$0xff]
        %v370 = vld [vmem:[%s1 + $0x10] sm:$0xff]
        %v371 = vld [vmem:[%s1 + $0x18] sm:$0xff]
        %v372 = vld [vmem:[%s1 + $0x20] sm:$0xff]
        %v373 = vld [vmem:[%s1 + $0x28] sm:$0xff]
        %v374 = vld [vmem:[%s1 + $0x30] sm:$0xff]
        %v375 = vld [vmem:[%s1 + $0x38] sm:$0xff]
        %v376 = vld [vmem:[%s1 + $0x40] sm:$0xff]
        %v377 = vld [vmem:[%s1 + $0x48] sm:$0xff]
        %v378 = vld [vmem:[%s1 + $0x50] sm:$0xff]
        %v379 = vld [vmem:[%s1 + $0x58] sm:$0xff]
        %v380 = vld [vmem:[%s1 + $0x60] sm:$0xff]
        %v381 = vld [vmem:[%s1 + $0x68] sm:$0xff]
        %v382 = vld [vmem:[%s1 + $0x70] sm:$0xff]
        %v383 = vld [vmem:[%s1 + $0x78] sm:$0xff]
        %vm392 = vcmask 1041409
        %v393 = vsel %vm392, %v361, %v360
        %vm394 = vcmask 1042434
        %v395 = vsel %vm394, %v362, %v393
        %vm396 = vcmask 1043459
        %v397 = vsel %vm396, %v363, %v395
        %vm398 = vcmask 1044484
        %v399 = vsel %vm398, %v364, %v397
        %vm400 = vcmask 1045509
        %v401 = vsel %vm400, %v365, %v399
        %vm402 = vcmask 1046534
        %v403 = vsel %vm402, %v366, %v401
        %vm404 = vcmask 1047559
        %v405 = vsel %vm404, %v367, %v403
        %407 = vmatprep.subr.mxu0 0.0
        %408 = vmatpush1.msra.mxu0 %v383
        %409 = vmatprep.subr.mxu0 0.0
        %410 = vmatpush1.msra.mxu0 %v382
        %411 = vmatprep.subr.mxu0 0.0
        %412 = vmatpush1.msra.mxu0 %v381
        %413 = vmatprep.subr.mxu0 0.0
        %414 = vmatpush1.msra.mxu0 %v380
        %415 = vmatprep.subr.mxu0 0.0
        %416 = vmatpush1.msra.mxu0 %v379
        %417 = vmatprep.subr.mxu0 0.0
        %418 = vmatpush1.msra.mxu0 %v378
        %419 = vmatprep.subr.mxu0 0.0
        %420 = vmatpush1.msra.mxu0 %v377
        %421 = vmatprep.subr.mxu0 0.0
        %422 = vmatpush1.msra.mxu0 %v376
        %423 = vmatprep.subr.mxu0 0.0
        %424 = vmatpush1.msra.mxu0 %v375
        %425 = vmatprep.subr.mxu0 0.0
        %426 = vmatpush1.msra.mxu0 %v374
        %427 = vmatprep.subr.mxu0 0.0
        %428 = vmatpush1.msra.mxu0 %v373
        %429 = vmatprep.subr.mxu0 0.0
        %430 = vmatpush1.msra.mxu0 %v372
        %431 = vmatprep.subr.mxu0 0.0
        %432 = vmatpush1.msra.mxu0 %v371
        %433 = vmatprep.subr.mxu0 0.0
        %434 = vmatpush1.msra.mxu0 %v370
        %435 = vmatprep.subr.mxu0 0.0
        %436 = vmatpush1.msra.mxu0 %v369
        %437 = vmatprep.subr.mxu0 0.0
        %438 = vmatpush1.msra.mxu0 %v368
        %439 = vmatprep.subr.mxu0 0.0
        %440 = vmatpush2.msra.mxu0 0.0
        %441 = vmatprep.subr.mxu0 0.0
        %442 = vmatpush2.msra.mxu0 0.0
        %443 = vmatprep.subr.mxu0 0.0
        %444 = vmatpush2.msra.mxu0 0.0
        %445 = vmatprep.subr.mxu0 0.0
        %446 = vmatpush2.msra.mxu0 0.0
        %447 = vmatprep.subr.mxu0 0.0
        %448 = vmatpush2.msra.mxu0 0.0
        %449 = vmatprep.subr.mxu0 0.0
        %450 = vmatpush2.msra.mxu0 0.0
        %451 = vmatprep.subr.mxu0 0.0
        %452 = vmatpush2.msra.mxu0 0.0
        %453 = vmatprep.subr.mxu0 0.0
        %454 = vmatpush2.msra.mxu0 0.0
        %455 = vmatprep.subr.mxu0 0.0
        %456 = vmatpush2.msra.mxu0 0.0
        %457 = vmatprep.subr.mxu0 0.0
        %458 = vmatpush2.msra.mxu0 0.0
        %459 = vmatprep.subr.mxu0 0.0
        %460 = vmatpush2.msra.mxu0 0.0
        %461 = vmatprep.subr.mxu0 0.0
        %462 = vmatpush2.msra.mxu0 0.0
        %463 = vmatprep.subr.mxu0 0.0
        %464 = vmatpush2.msra.mxu0 0.0
        %465 = vmatprep.subr.mxu0 0.0
        %466 = vmatpush2.msra.mxu0 0.0
        %467 = vmatprep.subr.mxu0 0.0
        %468 = vmatpush2.msra.mxu0 0.0
        %469 = vmatprep.subr.mxu0 0.0
        %470 = vmatpush2.msra.mxu0 0.0
        %471 = vmatprep.mubr.f32.mxu0 0.0
        %472 = vmatmul.mubr.f32.gmra.mxu0 %v405
        %v473 = vpop.f32.mrf.mxu0
        %v474 = vadd.f32 0.0, %v473
        %v475 = vpop.f32.mrf.mxu0
        %476 = vdwg.mxu0
        %v477 = vmax.f32 %v474, 0.0
        %v478 = vld [vmem:[%s2] sm:$0xff]
        %v479 = vld [vmem:[%s2 + $0x8] sm:$0xff]
        %v480 = vld [vmem:[%s2 + $0x10] sm:$0xff]
        %v481 = vld [vmem:[%s2 + $0x18] sm:$0xff]
        %vm482 = vcmask 261120
        %v484 = vsel %vm482, %v477, 0
        %486 = vmatprep.subr.mxu0 0.0
        %487 = vmatpush1.msra.mxu0 0.0
        %488 = vmatprep.subr.mxu0 0.0
        %489 = vmatpush1.msra.mxu0 0.0
        %490 = vmatprep.subr.mxu0 0.0
        %491 = vmatpush1.msra.mxu0 0.0
        %492 = vmatprep.subr.mxu0 0.0
        %493 = vmatpush1.msra.mxu0 0.0
        %494 = vmatprep.subr.mxu0 0.0
        %495 = vmatpush1.msra.mxu0 0.0
        %496 = vmatprep.subr.mxu0 0.0
        %497 = vmatpush1.msra.mxu0 0.0
        %498 = vmatprep.subr.mxu0 0.0
        %499 = vmatpush1.msra.mxu0 0.0
        %500 = vmatprep.subr.mxu0 0.0
        %501 = vmatpush1.msra.mxu0 0.0
        %502 = vmatprep.subr.mxu0 0.0
        %503 = vmatpush1.msra.mxu0 0.0
        %504 = vmatprep.subr.mxu0 0.0
        %505 = vmatpush1.msra.mxu0 0.0
        %506 = vmatprep.subr.mxu0 0.0
        %507 = vmatpush1.msra.mxu0 0.0
        %508 = vmatprep.subr.mxu0 0.0
        %509 = vmatpush1.msra.mxu0 0.0
        %510 = vmatprep.subr.mxu0 0.0
        %511 = vmatpush1.msra.mxu0 %v481
        %512 = vmatprep.subr.mxu0 0.0
        %513 = vmatpush1.msra.mxu0 %v480
        %514 = vmatprep.subr.mxu0 0.0
        %515 = vmatpush1.msra.mxu0 %v479
        %516 = vmatprep.subr.mxu0 0.0
        %517 = vmatpush1.msra.mxu0 %v478
        %518 = vmatprep.subr.mxu0 0.0
        %519 = vmatpush2.msra.mxu0 0.0
        %520 = vmatprep.subr.mxu0 0.0
        %521 = vmatpush2.msra.mxu0 0.0
        %522 = vmatprep.subr.mxu0 0.0
        %523 = vmatpush2.msra.mxu0 0.0
        %524 = vmatprep.subr.mxu0 0.0
        %525 = vmatpush2.msra.mxu0 0.0
        %526 = vmatprep.subr.mxu0 0.0
        %527 = vmatpush2.msra.mxu0 0.0
        %528 = vmatprep.subr.mxu0 0.0
        %529 = vmatpush2.msra.mxu0 0.0
        %530 = vmatprep.subr.mxu0 0.0
        %531 = vmatpush2.msra.mxu0 0.0
        %532 = vmatprep.subr.mxu0 0.0
        %533 = vmatpush2.msra.mxu0 0.0
        %534 = vmatprep.subr.mxu0 0.0
        %535 = vmatpush2.msra.mxu0 0.0
        %536 = vmatprep.subr.mxu0 0.0
        %537 = vmatpush2.msra.mxu0 0.0
        %538 = vmatprep.subr.mxu0 0.0
        %539 = vmatpush2.msra.mxu0 0.0
        %540 = vmatprep.subr.mxu0 0.0
        %541 = vmatpush2.msra.mxu0 0.0
        %542 = vmatprep.subr.mxu0 0.0
        %543 = vmatpush2.msra.mxu0 0.0
        %544 = vmatprep.subr.mxu0 0.0
        %545 = vmatpush2.msra.mxu0 0.0
        %546 = vmatprep.subr.mxu0 0.0
        %547 = vmatpush2.msra.mxu0 0.0
        %548 = vmatprep.subr.mxu0 0.0
        %549 = vmatpush2.msra.mxu0 0.0
        %550 = vmatprep.mubr.f32.mxu0 0.0
        %551 = vmatmul.mubr.f32.gmra.mxu0 %v484
        %v552 = vpop.f32.mrf.mxu0
        %v553 = vadd.f32 0.0, %v552
        %v554 = vpop.f32.mrf.mxu0
        %555 = vdwg.mxu0
        %v556 = vsub.f32 0.0, %v553
        %v557 = vmul.f32 %v556, 1.442695
        %v558 = vpow.pop %v557
        %v559 = vadd.f32 %v558, 1.0
        %v560 = vrcp.pop %v559
        %v561 = vmul.f32 1.0, %v560
        %v563 = vcombine.high %v561, %v561
        %v565 = vunpack.c.l.s4 1966171168
        %v566 = vunpack.c.0.s8 %v565
        %v567 = vlaneseq
        %v568 = vshrl.u32 %v567, 7
        %v569 = vsub.s32 %v566, %v568
        %v570 = vrot.slane %v561, %v569
        %v572 = vunpack.c.l.s4 1966171168
        %v573 = vunpack.c.0.s8 %v572
        %v574 = vlaneseq
        %v575 = vshrl.u32 %v574, 7
        %v576 = vsub.s32 %v573, %v575
        %v577 = vrot.slane %v563, %v576
        %v578 = vcombine.high %v570, %v570
        %v579 = vcombine.high %v577, %v577
        %v581 = vunpack.c.l.s4 1966171168
        %v582 = vunpack.c.0.s8 %v581
        %v583 = vlaneseq
        %v584 = vshrl.u32 %v583, 7
        %v585 = vsub.s32 %v582, %v584
        %v586 = vrot.slane %v570, %v585
        %v588 = vunpack.c.l.s4 1966171168
        %v589 = vunpack.c.0.s8 %v588
        %v590 = vlaneseq
        %v591 = vshrl.u32 %v590, 7
        %v592 = vsub.s32 %v589, %v591
        %v593 = vrot.slane %v577, %v592
        %v595 = vunpack.c.l.s4 1966171168
        %v596 = vunpack.c.0.s8 %v595
        %v597 = vlaneseq
        %v598 = vshrl.u32 %v597, 7
        %v599 = vsub.s32 %v596, %v598
        %v600 = vrot.slane %v578, %v599
        %v602 = vunpack.c.l.s4 1966171168
        %v603 = vunpack.c.0.s8 %v602
        %v604 = vlaneseq
        %v605 = vshrl.u32 %v604, 7
        %v606 = vsub.s32 %v603, %v605
        %v607 = vrot.slane %v579, %v606
        %v608 = vcombine.high %v586, %v586
        %v609 = vcombine.high %v593, %v593
        %v610 = vcombine.high %v600, %v600
        %v611 = vcombine.high %v607, %v607
        %v612 = vlaneseq
        %v613 = vshrl.u32 %v612, 7
        %v614 = vsub.s32 0, %v613
        %v615 = vrot.slane %v586, %v614
        %v616 = vlaneseq
        %v617 = vshrl.u32 %v616, 7
        %v618 = vsub.s32 0, %v617
        %v619 = vrot.slane %v600, %v618
        %v620 = vlaneseq
        %v621 = vshrl.u32 %v620, 7
        %v622 = vsub.s32 0, %v621
        %v623 = vrot.slane %v608, %v622
        %v624 = vlaneseq
        %v625 = vshrl.u32 %v624, 7
        %v626 = vsub.s32 0, %v625
        %v627 = vrot.slane %v610, %v626
        %v628 = vlaneseq
        %v629 = vshrl.u32 %v628, 7
        %v630 = vsub.s32 0, %v629
        %v631 = vrot.slane %v593, %v630
        %v632 = vlaneseq
        %v633 = vshrl.u32 %v632, 7
        %v634 = vsub.s32 0, %v633
        %v635 = vrot.slane %v607, %v634
        %v636 = vlaneseq
        %v637 = vshrl.u32 %v636, 7
        %v638 = vsub.s32 0, %v637
        %v639 = vrot.slane %v609, %v638
        %v640 = vlaneseq
        %v641 = vshrl.u32 %v640, 7
        %v642 = vsub.s32 0, %v641
        %v643 = vrot.slane %v611, %v642
        %v652 = vmul.f32 %v192, %v615
        %v653 = vmul.f32 %v193, %v615
        %v654 = vmul.f32 %v194, %v615
        %v655 = vmul.f32 %v195, %v615
        %v656 = vmul.f32 %v196, %v615
        %v657 = vmul.f32 %v197, %v615
        %v658 = vmul.f32 %v198, %v615
        %v659 = vmul.f32 %v199, %v615
        %v660 = vmul.f32 %v200, %v619
        %v661 = vmul.f32 %v201, %v619
        %v662 = vmul.f32 %v202, %v619
        %v663 = vmul.f32 %v203, %v619
        %v664 = vmul.f32 %v204, %v619
        %v665 = vmul.f32 %v205, %v619
        %v666 = vmul.f32 %v206, %v619
        %v667 = vmul.f32 %v207, %v619
        %v668 = vmul.f32 %v208, %v623
        %v669 = vmul.f32 %v209, %v623
        %v670 = vmul.f32 %v210, %v623
        %v671 = vmul.f32 %v211, %v623
        %v672 = vmul.f32 %v212, %v623
        %v673 = vmul.f32 %v213, %v623
        %v674 = vmul.f32 %v214, %v623
        %v675 = vmul.f32 %v215, %v623
        %v676 = vmul.f32 %v216, %v627
        %v677 = vmul.f32 %v217, %v627
        %v678 = vmul.f32 %v218, %v627
        %v679 = vmul.f32 %v219, %v627
        %v680 = vmul.f32 %v220, %v627
        %v681 = vmul.f32 %v221, %v627
        %v682 = vmul.f32 %v222, %v627
        %v683 = vmul.f32 %v223, %v627
        %v684 = vmul.f32 %v224, %v631
        %v685 = vmul.f32 %v225, %v631
        %v686 = vmul.f32 %v226, %v631
        %v687 = vmul.f32 %v227, %v631
        %v688 = vmul.f32 %v228, %v631
        %v689 = vmul.f32 %v229, %v631
        %v690 = vmul.f32 %v230, %v631
        %v691 = vmul.f32 %v231, %v631
        %v692 = vmul.f32 %v232, %v635
        %v693 = vmul.f32 %v233, %v635
        %v694 = vmul.f32 %v234, %v635
        %v695 = vmul.f32 %v235, %v635
        %v696 = vmul.f32 %v236, %v635
        %v697 = vmul.f32 %v237, %v635
        %v698 = vmul.f32 %v238, %v635
        %v699 = vmul.f32 %v239, %v635
        %v700 = vmul.f32 %v240, %v639
        %v701 = vmul.f32 %v241, %v639
        %v702 = vmul.f32 %v242, %v639
        %v703 = vmul.f32 %v243, %v639
        %v704 = vmul.f32 %v244, %v639
        %v705 = vmul.f32 %v245, %v639
        %v706 = vmul.f32 %v246, %v639
        %v707 = vmul.f32 %v247, %v639
        %v708 = vmul.f32 %v248, %v643
        %v709 = vmul.f32 %v249, %v643
        %v710 = vmul.f32 %v250, %v643
        %v711 = vmul.f32 %v251, %v643
        %v712 = vmul.f32 %v252, %v643
        %v713 = vmul.f32 %v253, %v643
        %v714 = vmul.f32 %v254, %v643
        %v715 = vmul.f32 %v255, %v643
        %716 = vst [vmem:[%s189] sm:$0xff] %v652
        %717 = vst [vmem:[%s189 + $0x8] sm:$0xff] %v653
        %718 = vst [vmem:[%s189 + $0x10] sm:$0xff] %v654
        %719 = vst [vmem:[%s189 + $0x18] sm:$0xff] %v655
        %720 = vst [vmem:[%s189 + $0x20] sm:$0xff] %v656
        %721 = vst [vmem:[%s189 + $0x28] sm:$0xff] %v657
        %722 = vst [vmem:[%s189 + $0x30] sm:$0xff] %v658
        %723 = vst [vmem:[%s189 + $0x38] sm:$0xff] %v659
        %724 = vst [vmem:[%s189 + $0x40] sm:$0xff] %v660
        %725 = vst [vmem:[%s189 + $0x48] sm:$0xff] %v661
        %726 = vst [vmem:[%s189 + $0x50] sm:$0xff] %v662
        %727 = vst [vmem:[%s189 + $0x58] sm:$0xff] %v663
        %728 = vst [vmem:[%s189 + $0x60] sm:$0xff] %v664
        %729 = vst [vmem:[%s189 + $0x68] sm:$0xff] %v665
        %730 = vst [vmem:[%s189 + $0x70] sm:$0xff] %v666
        %731 = vst [vmem:[%s189 + $0x78] sm:$0xff] %v667
        %732 = vst [vmem:[%s189 + $0x80] sm:$0xff] %v668
        %733 = vst [vmem:[%s189 + $0x88] sm:$0xff] %v669
        %734 = vst [vmem:[%s189 + $0x90] sm:$0xff] %v670
        %735 = vst [vmem:[%s189 + $0x98] sm:$0xff] %v671
        %736 = vst [vmem:[%s189 + $0xa0] sm:$0xff] %v672
        %737 = vst [vmem:[%s189 + $0xa8] sm:$0xff] %v673
        %738 = vst [vmem:[%s189 + $0xb0] sm:$0xff] %v674
        %739 = vst [vmem:[%s189 + $0xb8] sm:$0xff] %v675
        %740 = vst [vmem:[%s189 + $0xc0] sm:$0xff] %v676
        %741 = vst [vmem:[%s189 + $0xc8] sm:$0xff] %v677
        %742 = vst [vmem:[%s189 + $0xd0] sm:$0xff] %v678
        %743 = vst [vmem:[%s189 + $0xd8] sm:$0xff] %v679
        %744 = vst [vmem:[%s189 + $0xe0] sm:$0xff] %v680
        %745 = vst [vmem:[%s189 + $0xe8] sm:$0xff] %v681
        %746 = vst [vmem:[%s189 + $0xf0] sm:$0xff] %v682
        %747 = vst [vmem:[%s189 + $0xf8] sm:$0xff] %v683
        %748 = vst [vmem:[%s189 + $0x100] sm:$0xff] %v684
        %749 = vst [vmem:[%s189 + $0x108] sm:$0xff] %v685
        %750 = vst [vmem:[%s189 + $0x110] sm:$0xff] %v686
        %751 = vst [vmem:[%s189 + $0x118] sm:$0xff] %v687
        %752 = vst [vmem:[%s189 + $0x120] sm:$0xff] %v688
        %753 = vst [vmem:[%s189 + $0x128] sm:$0xff] %v689
        %754 = vst [vmem:[%s189 + $0x130] sm:$0xff] %v690
        %755 = vst [vmem:[%s189 + $0x138] sm:$0xff] %v691
        %756 = vst [vmem:[%s189 + $0x140] sm:$0xff] %v692
        %757 = vst [vmem:[%s189 + $0x148] sm:$0xff] %v693
        %758 = vst [vmem:[%s189 + $0x150] sm:$0xff] %v694
        %759 = vst [vmem:[%s189 + $0x158] sm:$0xff] %v695
        %760 = vst [vmem:[%s189 + $0x160] sm:$0xff] %v696
        %761 = vst [vmem:[%s189 + $0x168] sm:$0xff] %v697
        %762 = vst [vmem:[%s189 + $0x170] sm:$0xff] %v698
        %763 = vst [vmem:[%s189 + $0x178] sm:$0xff] %v699
        %764 = vst [vmem:[%s189 + $0x180] sm:$0xff] %v700
        %765 = vst [vmem:[%s189 + $0x188] sm:$0xff] %v701
        %766 = vst [vmem:[%s189 + $0x190] sm:$0xff] %v702
        %767 = vst [vmem:[%s189 + $0x198] sm:$0xff] %v703
        %768 = vst [vmem:[%s189 + $0x1a0] sm:$0xff] %v704
        %769 = vst [vmem:[%s189 + $0x1a8] sm:$0xff] %v705
        %770 = vst [vmem:[%s189 + $0x1b0] sm:$0xff] %v706
        %771 = vst [vmem:[%s189 + $0x1b8] sm:$0xff] %v707
        %772 = vst [vmem:[%s189 + $0x1c0] sm:$0xff] %v708
        %773 = vst [vmem:[%s189 + $0x1c8] sm:$0xff] %v709
        %774 = vst [vmem:[%s189 + $0x1d0] sm:$0xff] %v710
        %775 = vst [vmem:[%s189 + $0x1d8] sm:$0xff] %v711
        %776 = vst [vmem:[%s189 + $0x1e0] sm:$0xff] %v712
        %777 = vst [vmem:[%s189 + $0x1e8] sm:$0xff] %v713
        %778 = vst [vmem:[%s189 + $0x1f0] sm:$0xff] %v714
        %779 = vst [vmem:[%s189 + $0x1f8] sm:$0xff] %v715
        %s780 = sand.u32 %s96, 1
        %s781 = scalar_lea.sflag [#allocation4], %s780
        %s782 = sand.u32 %s96, 1
        %s783 = smul.addr %s782, 512
        %s784 = scalar_lea.vmem [#allocation5], %s783
        // Predicated region
        $region37: #{se_forward.1} parent=31 // pred_check
          %p785 = pneg %p106
        $region38: #{se_forward.1} parent=31 // pred_check_branch
          %787 = sbr.rel (%p785) target = $region40
        $region39: #{se_forward.1} parent=31 // pred_region
          %s788 = smul.u32 8, %s20
          %s790 = ssub.s32 8192, 8192
          %791 = vsyncadd %s781, %s790
          %s792 = smul.addr %s788, 8
          %s793 = smul.addr %s792, 128
          %s794 = scalar_lea.hbm %s3, %s793
          %s795 = sshll.u32 %s784, 4
          %s796 = int_to_ptr.vmem [resolvable:$true] %s795
          %801 = dma.vmem_to_hbm [thread:$0]  %s796, 8192, %s794, %s781, 128, 128, 8
        $region40: #{se_forward.1} parent=31 // pred_fallthru
          _
      $region32: #{se_forward.1} parent=5 // pred_fallthru
        _
      %p802 = scmp.le.s32.totalorder 2, %s15
      // Predicated region
      $region41: #{se_forward.1} parent=5 // pred_check
        %p803 = pneg %p802
      $region42: #{se_forward.1} parent=5 // pred_check_branch
        %805 = sbr.rel (%p803) target = $region44
      $region43: #{se_forward.1} parent=5 // pred_region
        %s806 = ssub.s32 %s15, 2
        // Predicated region
        $region45: #{se_forward.1} parent=43 // pred_check
          %p807 = pneg %p112
        $region46: #{se_forward.1} parent=43 // pred_check_branch
          %809 = sbr.rel (%p807) target = $region48
        $region47: #{se_forward.1} parent=43 // pred_region
          %s810 = sand.u32 %s97, 1
          %s811 = scalar_lea.sflag [#allocation4], %s810
          %s812 = sand.u32 %s97, 1
          %s813 = smul.addr %s812, 512
          %s814 = scalar_lea.vmem [#allocation5], %s813
          %815 = dma.done %s811, 8192
        $region48: #{se_forward.1} parent=43 // pred_fallthru
          _
      $region44: #{se_forward.1} parent=5 // pred_fallthru
        _
    $region6: #{se_forward.1} parent=1 // loop_footer
      %s19 = sadd.s32 1, %s15
    $region7: #{se_forward.1} parent=1 // loop_footer_branch
      %14 = sbr.rel target = $region3
    $region8: #{se_forward.1} parent=1 // loop_exit
      _
    %816 = vsyncpa [#allocation3], 1
    %s817 = scalar_lea.sflag [#allocation3], 1
    %818 = vsyncpa %s817, 1
    %819 = vsyncpa [#allocation4], 1
    %s820 = scalar_lea.sflag [#allocation4], 1
    %821 = vsyncpa %s820, 1

</llo_original>
